<compile_context>
chip_gen: v7x
topology: tpu7x:2x2x1
jax: 0.10.0
libtpu: 0.0.40
codegen_flags: <defaults>
</compile_context>

<pallas_src>
import jax
import jax.numpy as jnp
from jax.experimental import pallas as pl
from jax.experimental.pallas import tpu as pltpu


def _posenc_kernel(x_ref, w1_ref, b1_ref, w2_ref, b2_ref, o_ref):
    """One (batch, position-tile) step of: W2 @ relu(BNfold(W1 @ x)) + b2.

    x_ref:  (1, Cin, TN)  input coordinates, channels-major
    w1_ref: (F, Cin)      first 1x1-conv weight with BN scale folded in
    b1_ref: (F, 1)        first conv bias with BN scale/shift folded in
    w2_ref: (F, F)        second 1x1-conv weight (bf16)
    b2_ref: (F, 1)        second conv bias
    o_ref:  (1, F, TN)    output tile (PyTorch (B, F, N) layout)
    """
    x = x_ref[0].astype(jnp.float32)      # (Cin, TN)
    w1 = w1_ref[...]                      # (F, Cin)
    cin = w1.shape[1]

    # Conv1d(Cin -> F, k=1) + folded BN on the VPU: Cin is tiny (3), so three
    # broadcast multiply-adds beat a K=3 MXU matmul (which pads K to 128/256).
    h = b1_ref[...]                       # (F, 1); broadcasts to (F, TN)
    for c in range(cin):                  # static unroll (Cin is small)
        h = h + w1[:, c:c + 1] * x[c:c + 1, :]

    # ReLU
    h = jnp.maximum(h, 0.0)

    # Conv1d(F -> F, k=1) on the MXU: bf16 operands, f32 accumulation.
    out = jnp.dot(w2_ref[...], h.astype(jnp.bfloat16),
                  preferred_element_type=jnp.float32)
    out = out + b2_ref[...]

    o_ref[0] = out.astype(o_ref.dtype)


def conv_bn_positional_encoding(xyz, params, *, tile_n=1024):
    """Pallas implementation of ConvBNPositionalEncoding.forward.

    Args:
      xyz: (B, N, Cin) float coordinates.
      params: dict with keys w1 (F, Cin), b1 (F,), gamma, beta, running_mean,
              running_var (F,), w2 (F, F), b2 (F,), eps (float).
      tile_n: positions per grid step (rounded to a multiple of 128).
    Returns:
      (B, F, N) float32 embedded position features (PyTorch layout).
    """
    B, N, Cin = xyz.shape
    F = params["w1"].shape[0]

    # ---- glue: fold BatchNorm (inference mode) into conv1 ----
    inv_std = jax.lax.rsqrt(params["running_var"].astype(jnp.float32)
                            + params["eps"])
    scale = params["gamma"].astype(jnp.float32) * inv_std                 # (F,)
    w1_folded = params["w1"].astype(jnp.float32) * scale[:, None]         # (F, Cin)
    b1_folded = (params["b1"].astype(jnp.float32) * scale
                 + params["beta"].astype(jnp.float32)
                 - params["running_mean"].astype(jnp.float32) * scale)    # (F,)
    b1_folded = b1_folded.reshape(F, 1)
    w2 = params["w2"].astype(jnp.bfloat16)                                # (F, F)
    b2 = params["b2"].astype(jnp.float32).reshape(F, 1)

    # Channels-major input so positions sit on the lane axis (cheap: the input
    # is ~F/Cin times smaller than the output).
    x = xyz.astype(jnp.float32).transpose(0, 2, 1)                        # (B, Cin, N)

    # Pick a lane-aligned tile and pad N so the grid divides evenly.
    tile_n = max(128, (int(tile_n) // 128) * 128)
    n_pad_min = pl.cdiv(N, 128) * 128
    tile_n = min(tile_n, n_pad_min)
    n_pad = pl.cdiv(N, tile_n) * tile_n
    if n_pad != N:
        x = jnp.pad(x, ((0, 0), (0, 0), (0, n_pad - N)))

    grid = (B, n_pad // tile_n)

    out = pl.pallas_call(
        _posenc_kernel,
        out_shape=jax.ShapeDtypeStruct((B, F, n_pad), jnp.float32),
        grid_spec=pltpu.PrefetchScalarGridSpec(
            num_scalar_prefetch=0,
            grid=grid,
            in_specs=[
                pl.BlockSpec((1, Cin, tile_n), lambda b, j: (b, 0, j)),  # x
                pl.BlockSpec((F, Cin), lambda b, j: (0, 0)),             # W1 (BN-folded)
                pl.BlockSpec((F, 1), lambda b, j: (0, 0)),               # b1 (BN-folded)
                pl.BlockSpec((F, F), lambda b, j: (0, 0)),               # W2 (bf16)
                pl.BlockSpec((F, 1), lambda b, j: (0, 0)),               # b2
            ],
            out_specs=pl.BlockSpec((1, F, tile_n), lambda b, j: (b, 0, j)),
        ),
        compiler_params=pltpu.CompilerParams(
            dimension_semantics=("parallel", "parallel")),
    )(x, w1_folded, b1_folded, w2, b2)

    if n_pad != N:
        out = out[:, :, :N]
    return out


def _reference(xyz, params):
    """Plain-JAX f32 reference of the same forward pass (PyTorch semantics)."""
    x = xyz.astype(jnp.float32)                                   # (B, N, Cin)
    h = jnp.einsum("bnc,fc->bnf", x, params["w1"]) + params["b1"]
    inv_std = jax.lax.rsqrt(params["running_var"] + params["eps"])
    h = (h - params["running_mean"]) * inv_std * params["gamma"] + params["beta"]
    h = jnp.maximum(h, 0.0)
    out = jnp.einsum("bnf,gf->bng", h, params["w2"]) + params["b2"]
    return out.transpose(0, 2, 1)                                 # (B, F, N)


def _init_params(key, input_channel, num_pos_feats):
    """Deterministic synthetic parameter init (no checkpoint load)."""
    k = jax.random.split(key, 8)
    F, C = num_pos_feats, input_channel
    return {
        "w1": jax.random.normal(k[0], (F, C), jnp.float32) * 0.2,
        "b1": jax.random.normal(k[1], (F,), jnp.float32) * 0.05,
        "gamma": 1.0 + jax.random.normal(k[2], (F,), jnp.float32) * 0.05,
        "beta": jax.random.normal(k[3], (F,), jnp.float32) * 0.05,
        "running_mean": jax.random.normal(k[4], (F,), jnp.float32) * 0.1,
        "running_var": 1.0 + jax.random.uniform(k[5], (F,), jnp.float32) * 0.2,
        "w2": jax.random.normal(k[6], (F, F), jnp.float32) * 0.1,
        "b2": jax.random.normal(k[7], (F,), jnp.float32) * 0.05,
        "eps": 1e-5,
    }


if __name__ == "__main__":
    B, N = 2, 16
    input_channel = 3
    num_pos_feats = 32  # small stand-in for the default 288

    key = jax.random.PRNGKey(0)
    k_x, k_p = jax.random.split(key)
    xyz = jax.random.normal(k_x, (B, N, input_channel), jnp.float32)
    params = _init_params(k_p, input_channel, num_pos_feats)

    out = conv_bn_positional_encoding(xyz, params)
    out = jax.block_until_ready(out)

    ref = _reference(xyz, params)
    assert out.shape == (B, num_pos_feats, N), out.shape
    # bf16 MXU operands in the second conv -> loosened tolerance vs f32 ref.
    assert jnp.allclose(out, ref, atol=2e-2, rtol=2e-2), (
        float(jnp.max(jnp.abs(out - ref))))

    print("KERNEL_OK")
</pallas_src>

<mosaic_0001>
module attributes {stable_mosaic.version = 11 : i64} {
  func.func @_posenc_kernel(%arg0: i32, %arg1: i32, %arg2: memref<1x3x128xf32, #tpu.memory_space<vmem>>, %arg3: memref<32x3xf32, #tpu.memory_space<vmem>>, %arg4: memref<32x1xf32, #tpu.memory_space<vmem>>, %arg5: memref<32x32xbf16, #tpu.memory_space<vmem>>, %arg6: memref<32x1xf32, #tpu.memory_space<vmem>>, %arg7: memref<1x32x128xf32, #tpu.memory_space<vmem>>) attributes {dimension_semantics = [#tpu.dimension_semantics<parallel>, #tpu.dimension_semantics<parallel>], iteration_bounds = array<i64: 2, 1>, scalar_prefetch = 0 : i64, scratch_operands = 0 : i64, tpu.core_type = #tpu.core_type<tc>, window_params = [{transform_indices = @transform_0, window_bounds = array<i64: 1, 3, 128>}, {pipeline_mode = #tpu.pipeline_mode<synchronous>, transform_indices = @transform_1, window_bounds = array<i64: 32, 3>}, {pipeline_mode = #tpu.pipeline_mode<synchronous>, transform_indices = @transform_2, window_bounds = array<i64: 32, 1>}, {pipeline_mode = #tpu.pipeline_mode<synchronous>, transform_indices = @transform_3, window_bounds = array<i64: 32, 32>}, {pipeline_mode = #tpu.pipeline_mode<synchronous>, transform_indices = @transform_4, window_bounds = array<i64: 32, 1>}, {transform_indices = @transform_5, window_bounds = array<i64: 1, 32, 128>}]} {
    %c0 = arith.constant 0 : index
    %c0_0 = arith.constant 0 : index
    %c0_1 = arith.constant 0 : index
    %0 = vector.load %arg2[%c0, %c0_0, %c0_1] : memref<1x3x128xf32, #tpu.memory_space<vmem>>, vector<1x3x128xf32>
    %1 = vector.shape_cast %0 : vector<1x3x128xf32> to vector<3x128xf32>
    %c0_2 = arith.constant 0 : index
    %c0_3 = arith.constant 0 : index
    %2 = vector.load %arg3[%c0_2, %c0_3] : memref<32x3xf32, #tpu.memory_space<vmem>>, vector<32x3xf32>
    %c0_4 = arith.constant 0 : index
    %c0_5 = arith.constant 0 : index
    %3 = vector.load %arg4[%c0_4, %c0_5] : memref<32x1xf32, #tpu.memory_space<vmem>>, vector<32x1xf32>
    %4 = vector.extract_strided_slice %2 {offsets = [0, 0], sizes = [32, 1], strides = [1, 1]} : vector<32x3xf32> to vector<32x1xf32>
    %5 = vector.extract_strided_slice %1 {offsets = [0, 0], sizes = [1, 128], strides = [1, 1]} : vector<3x128xf32> to vector<1x128xf32>
    %6 = vector.broadcast %4 : vector<32x1xf32> to vector<32x128xf32>
    %7 = vector.broadcast %5 : vector<1x128xf32> to vector<32x128xf32>
    %8 = arith.mulf %6, %7 : vector<32x128xf32>
    %9 = vector.broadcast %3 : vector<32x1xf32> to vector<32x128xf32>
    %10 = arith.addf %9, %8 : vector<32x128xf32>
    %11 = vector.extract_strided_slice %2 {offsets = [0, 1], sizes = [32, 1], strides = [1, 1]} : vector<32x3xf32> to vector<32x1xf32>
    %12 = vector.extract_strided_slice %1 {offsets = [1, 0], sizes = [1, 128], strides = [1, 1]} : vector<3x128xf32> to vector<1x128xf32>
    %13 = vector.broadcast %11 : vector<32x1xf32> to vector<32x128xf32>
    %14 = vector.broadcast %12 : vector<1x128xf32> to vector<32x128xf32>
    %15 = arith.mulf %13, %14 : vector<32x128xf32>
    %16 = arith.addf %10, %15 : vector<32x128xf32>
    %17 = vector.extract_strided_slice %2 {offsets = [0, 2], sizes = [32, 1], strides = [1, 1]} : vector<32x3xf32> to vector<32x1xf32>
    %18 = vector.extract_strided_slice %1 {offsets = [2, 0], sizes = [1, 128], strides = [1, 1]} : vector<3x128xf32> to vector<1x128xf32>
    %19 = vector.broadcast %17 : vector<32x1xf32> to vector<32x128xf32>
    %20 = vector.broadcast %18 : vector<1x128xf32> to vector<32x128xf32>
    %21 = arith.mulf %19, %20 : vector<32x128xf32>
    %22 = arith.addf %16, %21 : vector<32x128xf32>
    %cst = arith.constant 0.000000e+00 : f32
    %23 = vector.broadcast %cst : f32 to vector<32x128xf32>
    %24 = arith.maximumf %22, %23 : vector<32x128xf32>
    %c0_6 = arith.constant 0 : index
    %c0_7 = arith.constant 0 : index
    %25 = vector.load %arg5[%c0_6, %c0_7] : memref<32x32xbf16, #tpu.memory_space<vmem>>, vector<32x32xbf16>
    %26 = arith.truncf %24 : vector<32x128xf32> to vector<32x128xbf16>
    %cst_8 = arith.constant dense<0.000000e+00> : vector<32x128xf32>
    %27 = tpu.matmul %25, %26, %cst_8 {dimension_numbers = #tpu.dot_dimension_numbers<[1], [0], [0], [1], [0, 0, 1, 1], [], []>} : vector<32x32xbf16>, vector<32x128xbf16>, vector<32x128xf32> -> vector<32x128xf32>
    %c0_9 = arith.constant 0 : index
    %c0_10 = arith.constant 0 : index
    %28 = vector.load %arg6[%c0_9, %c0_10] : memref<32x1xf32, #tpu.memory_space<vmem>>, vector<32x1xf32>
    %29 = vector.broadcast %28 : vector<32x1xf32> to vector<32x128xf32>
    %30 = arith.addf %27, %29 : vector<32x128xf32>
    %c0_11 = arith.constant 0 : index
    %c0_12 = arith.constant 0 : index
    %c0_13 = arith.constant 0 : index
    %31 = vector.load %arg7[%c0_11, %c0_12, %c0_13] : memref<1x32x128xf32, #tpu.memory_space<vmem>>, vector<1x32x128xf32>
    %32 = vector.shape_cast %31 : vector<1x32x128xf32> to vector<32x128xf32>
    %33 = vector.shape_cast %30 : vector<32x128xf32> to vector<1x32x128xf32>
    tpu.vector_store %arg7[%c0_11, %c0_12, %c0_13], %33 {strides = array<i32>} : memref<1x32x128xf32, #tpu.memory_space<vmem>>, vector<1x32x128xf32>,
    return
  }
  func.func @transform_0(%arg0: i32, %arg1: i32) -> (i32, i32, i32) {
    %c0_i32 = arith.constant 0 : i32
    %c0_i32_0 = arith.constant 0 : i32
    return %arg0, %c0_i32, %arg1 : i32, i32, i32
  }
  func.func @transform_1(%arg0: i32, %arg1: i32) -> (i32, i32) {
    %c0_i32 = arith.constant 0 : i32
    %c0_i32_0 = arith.constant 0 : i32
    %c0_i32_1 = arith.constant 0 : i32
    return %c0_i32, %c0_i32_0 : i32, i32
  }
  func.func @transform_2(%arg0: i32, %arg1: i32) -> (i32, i32) {
    %c0_i32 = arith.constant 0 : i32
    %c0_i32_0 = arith.constant 0 : i32
    %c0_i32_1 = arith.constant 0 : i32
    return %c0_i32, %c0_i32_0 : i32, i32
  }
  func.func @transform_3(%arg0: i32, %arg1: i32) -> (i32, i32) {
    %c0_i32 = arith.constant 0 : i32
    %c0_i32_0 = arith.constant 0 : i32
    %c0_i32_1 = arith.constant 0 : i32
    return %c0_i32, %c0_i32_0 : i32, i32
  }
  func.func @transform_4(%arg0: i32, %arg1: i32) -> (i32, i32) {
    %c0_i32 = arith.constant 0 : i32
    %c0_i32_0 = arith.constant 0 : i32
    %c0_i32_1 = arith.constant 0 : i32
    return %c0_i32, %c0_i32_0 : i32, i32
  }
  func.func @transform_5(%arg0: i32, %arg1: i32) -> (i32, i32, i32) {
    %c0_i32 = arith.constant 0 : i32
    %c0_i32_0 = arith.constant 0 : i32
    return %arg0, %c0_i32, %arg1 : i32, i32, i32
  }
}

</mosaic_0001>

<llo_original>
// kernel: tpu_custom_call.1
$region0: #{tpu_custom_call.1}
  #allocation0 [shape = 'u32[]', space=smem, size = 0x4, offset = 0x4, fixed_abs, tag = 'smem constant byte address 0x4 - core index']
  #allocation1 [shape = 'u32[144,128]{1,0:T(1,128)}', space=vmem, size = 0x12000, scoped, tag = 'internal scratch']
  %s0 = inlined_call_operand.vmem [shape: f32[2,3,128], index: 0, kind: input, shape index: {}]
  %s1 = inlined_call_operand.vmem [shape: f32[32,3], index: 1, kind: input, shape index: {}]
  %s2 = inlined_call_operand.vmem [shape: f32[32,1], index: 2, kind: input, shape index: {}]
  %s3 = inlined_call_operand.vmem [shape: bf16[32,32], index: 3, kind: input, shape index: {}]
  %s4 = inlined_call_operand.vmem [shape: f32[32,1], index: 4, kind: input, shape index: {}]
  %s5 = inlined_call_operand.hbm [shape: f32[2,32,128], index: 5, kind: output, shape index: {}]
  %s6 = sld [smem:[#allocation0]]
  $region53: #{tpu_custom_call.1} parent=0
    _
  %s8 = ssub.s32 1, %s6
  %s9 = scalar_select 0, %s8, %s6
  $region1: #{tpu_custom_call.1} parent=0
    #allocation2 [shape = 'u8[32768]{0}', space=vmem, size = 0x8000, scoped, tag = 'output window, operand 0']
    #allocation3 [shape = 's32[2]{0}', space=sflag, size = 0x8, scoped, tag = 'scoped memory for tpu_custom_call.1']
    %10 = vsyncpa [#allocation3], 0
    %s11 = scalar_lea.sflag [#allocation3], 1
    %12 = vsyncpa %s11, 0
    loop: start=0, step=1, limit=4
    $region2: #{tpu_custom_call.1} parent=1 // loop_pre_header
      _
    $region3: #{tpu_custom_call.1} parent=1 // loop_header
      %s14 = sphi 0, %s18
      %p15 = scmp.ge.s32.totalorder %s14, 4
      %s21 = sphi 0, %s33
      %s22 = sphi 0, %s29
      %s23 = sphi 0, %s21
      %s24 = sphi 0, %s22
      %s25 = sphi 0, %s23
      %s26 = sphi 0, %s24
      %s38 = sphi 0, %s40
      %s41 = sphi 0, %s38
      %s42 = sphi 0, %s41
      %s58 = sphi 0, %s42
      %s62 = sphi 0, %s62
      %s64 = sphi 0, %s62
      %s65 = sphi 0, %s64
      %s79 = sphi 0, %s65
      %s83 = sphi 0, %s83
      %s85 = sphi 0, %s83
      %s86 = sphi 0, %s85
      %s100 = sphi 0, %s86
      %s104 = sphi 0, %s104
      %s106 = sphi 0, %s104
      %s107 = sphi 0, %s106
      %s121 = sphi 0, %s107
      %s125 = sphi 0, %s125
      %s127 = sphi 0, %s125
      %s128 = sphi 0, %s127
      %s142 = sphi 0, %s128
      %s150 = sphi 0, %s152
      %s153 = sphi 0, %s150
      %s154 = sphi 0, %s153
      %s170 = sphi 0, %s154
    $region4: #{tpu_custom_call.1} parent=1 // loop_header_branch
      %17 = sbr.rel (%p15) target = $region8
    $region5: #{tpu_custom_call.1} parent=1 // loop_body
      %s19 = ssub.s32 %s14, 1
      %s20 = ssub.s32 %s14, 2
      %s27 = sadd.s32 1, %s22
      %p28 = scmp.ge.s32.totalorder %s27, 1
      %s29 = scalar_select %p28, 0, %s27
      %s30 = sadd.s32 1, %s21
      %s31 = scalar_select %p28, %s30, %s21
      %p32 = scmp.ge.s32.totalorder %s31, 2
      %s33 = scalar_select %p32, 0, %s31
      %s34 = ssub.s32 %s21, %s33
      %s35 = ssub.s32 %s22, %s29
      %s36 = sor.u32 %s34, %s35
      %p37 = scmp.eq.s32.totalorder %s36, 0
      %s39 = sadd.s32 %s38, 1
      %s40 = scalar_select %p37, %s38, %s39
      %p43 = pneg %p37
      %p44 = scmp.eq.s32.totalorder %s14, 1
      %p45 = por %p43, %p44
      %p46 = scmp.ne.s32.totalorder %s38, %s41
      %p47 = scmp.eq.s32.totalorder %s14, 0
      %p48 = por %p46, %p47
      %p49 = scmp.ne.s32.totalorder %s38, %s41
      %p50 = scmp.eq.s32.totalorder %s19, 1
      %p51 = por %p49, %p50
      %p52 = scmp.ne.s32.totalorder %s41, %s42
      %p53 = scmp.eq.s32.totalorder %s19, 0
      %p54 = por %p52, %p53
      %p55 = scmp.ne.s32.totalorder %s41, %s42
      %p56 = scmp.eq.s32.totalorder %s20, 1
      %p57 = por %p55, %p56
      %p59 = scmp.ne.s32.totalorder %s42, %s58
      %p60 = scmp.eq.s32.totalorder %s20, 0
      %p61 = por %p59, %p60
      %s63 = sadd.s32 %s62, 1
      %p66 = scmp.eq.s32.totalorder %s14, 1
      %p67 = scmp.ne.s32.totalorder %s62, %s64
      %p68 = scmp.eq.s32.totalorder %s14, 0
      %p69 = por %p67, %p68
      %p70 = scmp.ne.s32.totalorder %s62, %s64
      %p71 = scmp.eq.s32.totalorder %s19, 1
      %p72 = por %p70, %p71
      %p73 = scmp.ne.s32.totalorder %s64, %s65
      %p74 = scmp.eq.s32.totalorder %s19, 0
      %p75 = por %p73, %p74
      %p76 = scmp.ne.s32.totalorder %s64, %s65
      %p77 = scmp.eq.s32.totalorder %s20, 1
      %p78 = por %p76, %p77
      %p80 = scmp.ne.s32.totalorder %s65, %s79
      %p81 = scmp.eq.s32.totalorder %s20, 0
      %p82 = por %p80, %p81
      %s84 = sadd.s32 %s83, 1
      %p87 = scmp.eq.s32.totalorder %s14, 1
      %p88 = scmp.ne.s32.totalorder %s83, %s85
      %p89 = scmp.eq.s32.totalorder %s14, 0
      %p90 = por %p88, %p89
      %p91 = scmp.ne.s32.totalorder %s83, %s85
      %p92 = scmp.eq.s32.totalorder %s19, 1
      %p93 = por %p91, %p92
      %p94 = scmp.ne.s32.totalorder %s85, %s86
      %p95 = scmp.eq.s32.totalorder %s19, 0
      %p96 = por %p94, %p95
      %p97 = scmp.ne.s32.totalorder %s85, %s86
      %p98 = scmp.eq.s32.totalorder %s20, 1
      %p99 = por %p97, %p98
      %p101 = scmp.ne.s32.totalorder %s86, %s100
      %p102 = scmp.eq.s32.totalorder %s20, 0
      %p103 = por %p101, %p102
      %s105 = sadd.s32 %s104, 1
      %p108 = scmp.eq.s32.totalorder %s14, 1
      %p109 = scmp.ne.s32.totalorder %s104, %s106
      %p110 = scmp.eq.s32.totalorder %s14, 0
      %p111 = por %p109, %p110
      %p112 = scmp.ne.s32.totalorder %s104, %s106
      %p113 = scmp.eq.s32.totalorder %s19, 1
      %p114 = por %p112, %p113
      %p115 = scmp.ne.s32.totalorder %s106, %s107
      %p116 = scmp.eq.s32.totalorder %s19, 0
      %p117 = por %p115, %p116
      %p118 = scmp.ne.s32.totalorder %s106, %s107
      %p119 = scmp.eq.s32.totalorder %s20, 1
      %p120 = por %p118, %p119
      %p122 = scmp.ne.s32.totalorder %s107, %s121
      %p123 = scmp.eq.s32.totalorder %s20, 0
      %p124 = por %p122, %p123
      %s126 = sadd.s32 %s125, 1
      %p129 = scmp.eq.s32.totalorder %s14, 1
      %p130 = scmp.ne.s32.totalorder %s125, %s127
      %p131 = scmp.eq.s32.totalorder %s14, 0
      %p132 = por %p130, %p131
      %p133 = scmp.ne.s32.totalorder %s125, %s127
      %p134 = scmp.eq.s32.totalorder %s19, 1
      %p135 = por %p133, %p134
      %p136 = scmp.ne.s32.totalorder %s127, %s128
      %p137 = scmp.eq.s32.totalorder %s19, 0
      %p138 = por %p136, %p137
      %p139 = scmp.ne.s32.totalorder %s127, %s128
      %p140 = scmp.eq.s32.totalorder %s20, 1
      %p141 = por %p139, %p140
      %p143 = scmp.ne.s32.totalorder %s128, %s142
      %p144 = scmp.eq.s32.totalorder %s20, 0
      %p145 = por %p143, %p144
      %s146 = ssub.s32 %s21, %s33
      %s147 = ssub.s32 %s22, %s29
      %s148 = sor.u32 %s146, %s147
      %p149 = scmp.eq.s32.totalorder %s148, 0
      %s151 = sadd.s32 %s150, 1
      %s152 = scalar_select %p149, %s150, %s151
      %p155 = pneg %p149
      %p156 = scmp.eq.s32.totalorder %s14, 1
      %p157 = por %p155, %p156
      %p158 = scmp.ne.s32.totalorder %s150, %s153
      %p159 = scmp.eq.s32.totalorder %s14, 0
      %p160 = por %p158, %p159
      %p161 = scmp.ne.s32.totalorder %s150, %s153
      %p162 = scmp.eq.s32.totalorder %s19, 1
      %p163 = por %p161, %p162
      %p164 = scmp.ne.s32.totalorder %s153, %s154
      %p165 = scmp.eq.s32.totalorder %s19, 0
      %p166 = por %p164, %p165
      %p167 = scmp.ne.s32.totalorder %s153, %s154
      %p168 = scmp.eq.s32.totalorder %s20, 1
      %p169 = por %p167, %p168
      %p171 = scmp.ne.s32.totalorder %s154, %s170
      %p172 = scmp.eq.s32.totalorder %s20, 0
      %p173 = por %p171, %p172
      %p174 = scmp.le.s32.totalorder 1, %s14
      %p175 = scmp.lt.s32.totalorder %s14, 3
      %p176 = pnand %p174, %p175
      %p177 = pneg %p176
      // Predicated region
      $region9: #{tpu_custom_call.1} parent=5 // pred_check
        _
      $region10: #{tpu_custom_call.1} parent=5 // pred_check_branch
        %179 = sbr.rel (%p176) target = $region12
      $region11: #{tpu_custom_call.1} parent=5 // pred_region
        %s180 = ssub.s32 %s14, 1
        // Predicated region
        $region13: #{tpu_custom_call.1} parent=11 // pred_check
          %p181 = pneg %p75
        $region14: #{tpu_custom_call.1} parent=11 // pred_check_branch
          %183 = sbr.rel (%p181) target = $region16
        $region15: #{tpu_custom_call.1} parent=11 // pred_region
          _
        $region16: #{tpu_custom_call.1} parent=11 // pred_fallthru
          _
        // Predicated region
        $region17: #{tpu_custom_call.1} parent=11 // pred_check
          %p184 = pneg %p96
        $region18: #{tpu_custom_call.1} parent=11 // pred_check_branch
          %186 = sbr.rel (%p184) target = $region20
        $region19: #{tpu_custom_call.1} parent=11 // pred_region
          _
        $region20: #{tpu_custom_call.1} parent=11 // pred_fallthru
          _
        // Predicated region
        $region21: #{tpu_custom_call.1} parent=11 // pred_check
          %p187 = pneg %p117
        $region22: #{tpu_custom_call.1} parent=11 // pred_check_branch
          %189 = sbr.rel (%p187) target = $region24
        $region23: #{tpu_custom_call.1} parent=11 // pred_region
          _
        $region24: #{tpu_custom_call.1} parent=11 // pred_fallthru
          _
        // Predicated region
        $region25: #{tpu_custom_call.1} parent=11 // pred_check
          %p190 = pneg %p138
        $region26: #{tpu_custom_call.1} parent=11 // pred_check_branch
          %192 = sbr.rel (%p190) target = $region28
        $region27: #{tpu_custom_call.1} parent=11 // pred_region
          _
        $region28: #{tpu_custom_call.1} parent=11 // pred_fallthru
          _
      $region12: #{tpu_custom_call.1} parent=5 // pred_fallthru
        _
      %p193 = scmp.lt.s32.totalorder %s14, 2
      // Predicated region
      $region29: #{tpu_custom_call.1} parent=5 // pred_check
        %p194 = pneg %p193
      $region30: #{tpu_custom_call.1} parent=5 // pred_check_branch
        %196 = sbr.rel (%p194) target = $region32
      $region31: #{tpu_custom_call.1} parent=5 // pred_region
        // Predicated region
        $region33: #{tpu_custom_call.1} parent=31 // pred_check
          %p197 = pneg %p48
        $region34: #{tpu_custom_call.1} parent=31 // pred_check_branch
          %199 = sbr.rel (%p197) target = $region36
        $region35: #{tpu_custom_call.1} parent=31 // pred_region
          %p200 = scmp.lt.s32.totalorder %s21, 1
          %s201 = scalar_select %p200, %s21, 1
          %p202 = scmp.lt.s32.totalorder %s22, 0
          %s203 = scalar_select %p202, %s22, 0
          %s204 = sadd.s32 %s203, %s201
          %s205 = smul.addr %s204, 4
          %s206 = scalar_lea.vmem %s0, %s205
        $region36: #{tpu_custom_call.1} parent=31 // pred_fallthru
          _
      $region32: #{tpu_custom_call.1} parent=5 // pred_fallthru
        _
      %p207 = scmp.le.s32.totalorder 1, %s14
      %p208 = scmp.lt.s32.totalorder %s14, 3
      %p209 = pnand %p207, %p208
      %p210 = pneg %p209
      // Predicated region
      $region37: #{tpu_custom_call.1} parent=5 // pred_check
        _
      $region38: #{tpu_custom_call.1} parent=5 // pred_check_branch
        %212 = sbr.rel (%p209) target = $region40
      $region39: #{tpu_custom_call.1} parent=5 // pred_region
        %s213 = ssub.s32 %s14, 1
        %p214 = scmp.lt.s32.totalorder %s23, 1
        %s215 = scalar_select %p214, %s23, 1
        %p216 = scmp.lt.s32.totalorder %s24, 0
        %s217 = scalar_select %p216, %s24, 0
        %s218 = sadd.s32 %s217, %s215
        %s219 = smul.addr %s218, 4
        %s220 = scalar_lea.vmem %s0, %s219
        %p221 = pneg %p54
        %p222 = pneg %p51
        %p223 = pneg %p75
        %p224 = pneg %p72
        %p225 = pneg %p96
        %p226 = pneg %p93
        %p227 = pneg %p117
        %p228 = pneg %p114
        %p229 = pneg %p138
        %p230 = pneg %p135
        %p231 = pneg %p166
        %p232 = pneg %p163
        %s233 = sand.u32 %s153, 1
        %s234 = scalar_lea.sflag [#allocation3], %s233
        %s235 = sand.u32 %s153, 1
        %s236 = smul.addr %s235, 32
        %s237 = scalar_lea.vmem [#allocation2], %s236
        %p238 = scmp.lt.s32.totalorder %s23, 1
        %s239 = scalar_select %p238, %s23, 1
        %p240 = scmp.lt.s32.totalorder %s24, 0
        %s241 = scalar_select %p240, %s24, 0
        %s242 = sadd.s32 %s241, %s239
        %s243 = smul.addr %s242, 4
        %s244 = scalar_lea.vmem %s0, %s243
        %v246 = vld [vmem:[%s244] sm:$0x7]
        %v247 = vld [vmem:[%s1] sm:$0xff]
        %v248 = vld [vmem:[%s1 + $0x8] sm:$0xff]
        %v249 = vld [vmem:[%s1 + $0x10] sm:$0xff]
        %v250 = vld [vmem:[%s1 + $0x18] sm:$0xff]
        %v251 = vld [vmem:[%s2] sm:$0xff]
        %v252 = vld [vmem:[%s2 + $0x8] sm:$0xff]
        %v253 = vld [vmem:[%s2 + $0x10] sm:$0xff]
        %v254 = vld [vmem:[%s2 + $0x18] sm:$0xff]
        %256 = vset.pattern.permute.xlu0 0
        %257 = vperm.xlu0 %256, %v247
        %v258 = vpop.permute.xlu0 %257
        %261 = vset.pattern.permute.xlu0 0
        %262 = vperm.xlu0 %261, %v248
        %v263 = vpop.permute.xlu0 %262
        %266 = vset.pattern.permute.xlu0 0
        %267 = vperm.xlu0 %266, %v249
        %v268 = vpop.permute.xlu0 %267
        %271 = vset.pattern.permute.xlu0 0
        %272 = vperm.xlu0 %271, %v250
        %v273 = vpop.permute.xlu0 %272
        %v275 = vlaneseq
        %v276 = vshrl.u32 %v275, 7
        %v277 = vsub.s32 0, %v276
        %v278 = vrot.slane %v246, %v277
        %v279 = vmul.f32 %v258, %v278
        %v280 = vmul.f32 %v263, %v278
        %v281 = vmul.f32 %v268, %v278
        %v282 = vmul.f32 %v273, %v278
        %284 = vset.pattern.permute.xlu0 0
        %285 = vperm.xlu0 %284, %v251
        %v286 = vpop.permute.xlu0 %285
        %289 = vset.pattern.permute.xlu0 0
        %290 = vperm.xlu0 %289, %v252
        %v291 = vpop.permute.xlu0 %290
        %294 = vset.pattern.permute.xlu0 0
        %295 = vperm.xlu0 %294, %v253
        %v296 = vpop.permute.xlu0 %295
        %299 = vset.pattern.permute.xlu0 0
        %300 = vperm.xlu0 %299, %v254
        %v301 = vpop.permute.xlu0 %300
        %v303 = vadd.f32 %v286, %v279
        %v304 = vadd.f32 %v291, %v280
        %v305 = vadd.f32 %v296, %v281
        %v306 = vadd.f32 %v301, %v282
        %307 = vset.pattern.permute.xlu0 1
        %308 = vperm.xlu0 %307, %v247
        %v309 = vpop.permute.xlu0 %308
        %311 = vset.pattern.permute.xlu0 1
        %312 = vperm.xlu0 %311, %v248
        %v313 = vpop.permute.xlu0 %312
        %315 = vset.pattern.permute.xlu0 1
        %316 = vperm.xlu0 %315, %v249
        %v317 = vpop.permute.xlu0 %316
        %319 = vset.pattern.permute.xlu0 1
        %320 = vperm.xlu0 %319, %v250
        %v321 = vpop.permute.xlu0 %320
        %v323 = vlaneseq
        %v324 = vshrl.u32 %v323, 7
        %v325 = vsub.s32 1, %v324
        %v326 = vrot.slane %v246, %v325
        %v327 = vmul.f32 %v309, %v326
        %v328 = vmul.f32 %v313, %v326
        %v329 = vmul.f32 %v317, %v326
        %v330 = vmul.f32 %v321, %v326
        %v331 = vadd.f32 %v303, %v327
        %v332 = vadd.f32 %v304, %v328
        %v333 = vadd.f32 %v305, %v329
        %v334 = vadd.f32 %v306, %v330
        %335 = vset.pattern.permute.xlu0 2
        %336 = vperm.xlu0 %335, %v247
        %v337 = vpop.permute.xlu0 %336
        %339 = vset.pattern.permute.xlu0 2
        %340 = vperm.xlu0 %339, %v248
        %v341 = vpop.permute.xlu0 %340
        %343 = vset.pattern.permute.xlu0 2
        %344 = vperm.xlu0 %343, %v249
        %v345 = vpop.permute.xlu0 %344
        %347 = vset.pattern.permute.xlu0 2
        %348 = vperm.xlu0 %347, %v250
        %v349 = vpop.permute.xlu0 %348
        %v351 = vlaneseq
        %v352 = vshrl.u32 %v351, 7
        %v353 = vsub.s32 2, %v352
        %v354 = vrot.slane %v246, %v353
        %v355 = vmul.f32 %v337, %v354
        %v356 = vmul.f32 %v341, %v354
        %v357 = vmul.f32 %v345, %v354
        %v358 = vmul.f32 %v349, %v354
        %v359 = vadd.f32 %v331, %v355
        %v360 = vadd.f32 %v332, %v356
        %v361 = vadd.f32 %v333, %v357
        %v362 = vadd.f32 %v334, %v358
        %v363 = vmax.f32 %v359, 0.0
        %v364 = vmax.f32 %v360, 0.0
        %v365 = vmax.f32 %v361, 0.0
        %v366 = vmax.f32 %v362, 0.0
        %v367 = vld [vmem:[%s3] sm:$0xf]
        %v368 = vld [vmem:[%s3 + $0x4] sm:$0xf]
        %v369 = vld [vmem:[%s3 + $0x8] sm:$0xf]
        %v370 = vld [vmem:[%s3 + $0xc] sm:$0xf]
        %v371 = vpack.c.bf16 %v364, %v363
        %v372 = vpack.c.bf16 %v366, %v365
        %v373 = vld [vmem:[%s4] sm:$0xff]
        %v374 = vld [vmem:[%s4 + $0x8] sm:$0xff]
        %v375 = vld [vmem:[%s4 + $0x10] sm:$0xff]
        %v376 = vld [vmem:[%s4 + $0x18] sm:$0xff]
        %378 = vset.pattern.permute.xlu0 0
        %379 = vperm.xlu0 %378, %v373
        %v380 = vpop.permute.xlu0 %379
        %383 = vset.pattern.permute.xlu0 0
        %384 = vperm.xlu0 %383, %v374
        %v385 = vpop.permute.xlu0 %384
        %388 = vset.pattern.permute.xlu0 0
        %389 = vperm.xlu0 %388, %v375
        %v390 = vpop.permute.xlu0 %389
        %393 = vset.pattern.permute.xlu0 0
        %394 = vperm.xlu0 %393, %v376
        %v395 = vpop.permute.xlu0 %394
        %v401 = vunpack.c.l.b16 %v367
        %v402 = vunpack.c.l.b16 %v368
        %v403 = vunpack.c.l.b16 %v369
        %v404 = vunpack.c.l.b16 %v370
        %v405 = vpack.c.b16 %v402, %v401
        %v406 = vpack.c.b16 %v404, %v403
        %vm407 = vcmask 261120
        %v409 = vsel %vm407, %v405, 0
        %v412 = vsel %vm407, %v406, 0
        %414 = vmatprep.subr.bf16.mxu0 0
        %415 = vmatpush1.bf16.msra.mxu0 %v371
        %416 = vmatprep.subr.bf16.mxu0 0
        %417 = vmatpush1.bf16.msra.mxu0 %v372
        %418 = vmatprep.subr.bf16.mxu0 0
        %419 = vmatpush1.bf16.msra.mxu0 0
        %420 = vmatprep.subr.bf16.mxu0 0
        %421 = vmatpush1.bf16.msra.mxu0 0
        %422 = vmatprep.subr.bf16.mxu0 0
        %423 = vmatpush1.bf16.msra.mxu0 0
        %424 = vmatprep.subr.bf16.mxu0 0
        %425 = vmatpush1.bf16.msra.mxu0 0
        %426 = vmatprep.subr.bf16.mxu0 0
        %427 = vmatpush1.bf16.msra.mxu0 0
        %428 = vmatprep.subr.bf16.mxu0 0
        %429 = vmatpush1.bf16.msra.mxu0 0
        %430 = vmatprep.subr.bf16.mxu0 0
        %431 = vmatpush1.bf16.msra.mxu0 0
        %432 = vmatprep.subr.bf16.mxu0 0
        %433 = vmatpush1.bf16.msra.mxu0 0
        %434 = vmatprep.subr.bf16.mxu0 0
        %435 = vmatpush1.bf16.msra.mxu0 0
        %436 = vmatprep.subr.bf16.mxu0 0
        %437 = vmatpush1.bf16.msra.mxu0 0
        %438 = vmatprep.subr.bf16.mxu0 0
        %439 = vmatpush1.bf16.msra.mxu0 0
        %440 = vmatprep.subr.bf16.mxu0 0
        %441 = vmatpush1.bf16.msra.mxu0 0
        %442 = vmatprep.subr.bf16.mxu0 0
        %443 = vmatpush1.bf16.msra.mxu0 0
        %444 = vmatprep.subr.bf16.mxu0 0
        %445 = vmatpush1.bf16.msra.mxu0 0
        %446 = vmatprep.mubr.bf16.mxu0 0
        %447 = vmatmul.mubr.bf16.gmra.mrb[0].mxu0 %v409
        %v448 = vpop.f32.mrb[0].mxu0
        %v449 = vadd.f32 %v380, %v448
        %v450 = vpop.f32.mrb[0].mxu0
        %v451 = vpop.f32.mrb[0].mxu0
        %v452 = vadd.f32 %v385, %v451
        %v453 = vpop.f32.mrb[0].mxu0
        %454 = vmatprep.mubr.bf16.mxu0 0
        %455 = vmatmul.mubr.bf16.gmra.mrb[0].mxu0 %v412
        %v456 = vpop.f32.mrb[0].mxu0
        %v457 = vadd.f32 %v390, %v456
        %v458 = vpop.f32.mrb[0].mxu0
        %v459 = vpop.f32.mrb[0].mxu0
        %v460 = vadd.f32 %v395, %v459
        %v461 = vpop.f32.mrb[0].mxu0
        %462 = vdwg.mxu0
        %463 = vst [vmem:[%s237] sm:$0xff] %v449
        %464 = vst [vmem:[%s237 + $0x8] sm:$0xff] %v452
        %465 = vst [vmem:[%s237 + $0x10] sm:$0xff] %v457
        %466 = vst [vmem:[%s237 + $0x18] sm:$0xff] %v460
        %s467 = sand.u32 %s153, 1
        %s468 = scalar_lea.sflag [#allocation3], %s467
        %s469 = sand.u32 %s153, 1
        %s470 = smul.addr %s469, 32
        %s471 = scalar_lea.vmem [#allocation2], %s470
        // Predicated region
        $region41: #{tpu_custom_call.1} parent=39 // pred_check
          %p472 = pneg %p163
        $region42: #{tpu_custom_call.1} parent=39 // pred_check_branch
          %474 = sbr.rel (%p472) target = $region44
        $region43: #{tpu_custom_call.1} parent=39 // pred_region
          %s476 = ssub.s32 512, 512
          %477 = vsyncadd %s468, %s476
          %s478 = smul.addr %s23, 4
          %s479 = sadd.s32 %s24, %s478
          %s480 = smul.addr %s479, 128
          %s481 = scalar_lea.hbm %s5, %s480
          %s482 = sshll.u32 %s471, 4
          %s483 = int_to_ptr.vmem [resolvable:$true] %s482
          %488 = dma.vmem_to_hbm [thread:$0]  %s483, 512, %s481, %s468, 128, 128, 8
        $region44: #{tpu_custom_call.1} parent=39 // pred_fallthru
          _
      $region40: #{tpu_custom_call.1} parent=5 // pred_fallthru
        _
      %p489 = scmp.le.s32.totalorder 2, %s14
      // Predicated region
      $region45: #{tpu_custom_call.1} parent=5 // pred_check
        %p490 = pneg %p489
      $region46: #{tpu_custom_call.1} parent=5 // pred_check_branch
        %492 = sbr.rel (%p490) target = $region48
      $region47: #{tpu_custom_call.1} parent=5 // pred_region
        %s493 = ssub.s32 %s14, 2
        // Predicated region
        $region49: #{tpu_custom_call.1} parent=47 // pred_check
          %p494 = pneg %p169
        $region50: #{tpu_custom_call.1} parent=47 // pred_check_branch
          %496 = sbr.rel (%p494) target = $region52
        $region51: #{tpu_custom_call.1} parent=47 // pred_region
          %s497 = sand.u32 %s154, 1
          %s498 = scalar_lea.sflag [#allocation3], %s497
          %s499 = sand.u32 %s154, 1
          %s500 = smul.addr %s499, 32
          %s501 = scalar_lea.vmem [#allocation2], %s500
          %502 = dma.done %s498, 512
        $region52: #{tpu_custom_call.1} parent=47 // pred_fallthru
          _
      $region48: #{tpu_custom_call.1} parent=5 // pred_fallthru
        _
    $region6: #{tpu_custom_call.1} parent=1 // loop_footer
      %s18 = sadd.s32 1, %s14
    $region7: #{tpu_custom_call.1} parent=1 // loop_footer_branch
      %13 = sbr.rel target = $region3
    $region8: #{tpu_custom_call.1} parent=1 // loop_exit
      _
    %503 = vsyncpa [#allocation3], 1
    %s504 = scalar_lea.sflag [#allocation3], 1
    %505 = vsyncpa %s504, 1

</llo_original>
